<compile_context>
chip_gen: v6e
topology: v6e:2x2x1
jax: 0.10.0
libtpu: 0.0.40
codegen_flags: <defaults>
</compile_context>

<pallas_src>
import jax
import jax.numpy as jnp
from jax.experimental import pallas as pl
from jax.experimental.pallas import tpu as pltpu


def _interp_matrix(out_size, in_size):
    """(out_size, in_size) row-interpolation matrix, align_corners=True."""
    if in_size == 1:
        return jnp.ones((out_size, 1), dtype=jnp.float32)
    scale = (in_size - 1) / (out_size - 1)
    src = jnp.arange(out_size, dtype=jnp.float32) * scale
    i0 = jnp.clip(jnp.floor(src).astype(jnp.int32), 0, in_size - 1)
    i1 = jnp.clip(i0 + 1, 0, in_size - 1)
    w1 = src - i0.astype(jnp.float32)
    w0 = 1.0 - w1
    oh0 = jax.nn.one_hot(i0, in_size, dtype=jnp.float32)
    oh1 = jax.nn.one_hot(i1, in_size, dtype=jnp.float32)
    return w0[:, None] * oh0 + w1[:, None] * oh1


def _pick_tb(B, per_slice_bytes, budget_bytes):
    """Largest TB dividing B with TB*per_slice <= budget and grid length >= 2.

    Prefers a sublane-aligned (multiple-of-8) divisor when one exists within
    2x of the best divisor, so output blocks store with unmasked `vst`.
    """
    cap = max(1, int(budget_bytes // max(per_slice_bytes, 1)))
    tb = int(min(cap, B))
    if B >= 2:
        tb = min(tb, B // 2)          # grid >= 2 so both v7x TensorCores work
    tb = max(tb, 1)
    while tb > 1 and B % tb != 0:     # exact blocks, no ragged tail
        tb -= 1
    if tb % 8 != 0:                   # try to find a sublane-aligned divisor
        cand = (tb // 8) * 8
        while cand >= max(8, tb // 2):
            if B % cand == 0:
                return cand
            cand -= 8
    return tb


def _kron_upsample_kernel(kt_ref, x_ref, o_ref):
    # kt: (H*W, Hout*Wout) resident; x: (1, TB, H*W); o: (1, TB, Hout*Wout)
    x = x_ref[0].astype(jnp.float32)
    y = jnp.dot(x, kt_ref[...], preferred_element_type=jnp.float32)
    o_ref[0] = y.astype(o_ref.dtype)


def _separable_upsample_kernel(wy_ref, wxt_ref, x_ref, o_ref):
    # wy: (Hout, H), wxt: (W, Wout) resident; x: (TB, H, W); o: (TB, Hout, Wout)
    x = x_ref[...].astype(jnp.float32)
    tb, h, w = x.shape
    hout = wy_ref.shape[0]
    wout = wxt_ref.shape[1]
    # Stage 1: height interpolation as one batched MXU matmul (no transposes).
    wy_b = jnp.broadcast_to(wy_ref[...], (tb, hout, h))
    tmp = jnp.einsum("boh,bhw->bow", wy_b, x,
                     preferred_element_type=jnp.float32)          # (TB, Hout, W)
    # Stage 2: width interpolation as ONE flattened MXU matmul (amortizes MXU
    # pipeline fill across the whole block instead of TB tiny matmuls).
    if hout % 8 == 0:   # (TB, Hout) merge is sublane-aligned -> layout-free
        out = jnp.dot(tmp.reshape(tb * hout, w), wxt_ref[...],
                      preferred_element_type=jnp.float32)
        out = out.reshape(tb, hout, wout)
    else:               # odd Hout fallback: keep the batched (layout-safe) form
        out = jnp.einsum("bow,wt->bot", tmp, wxt_ref[...],
                         preferred_element_type=jnp.float32)
    o_ref[...] = out.astype(o_ref.dtype)


_VMEM_BLOCK_BUDGET = 8 * 1024 * 1024    # conservative: fits v5e 16 MiB default
_KRON_KT_LIMIT = 2 * 1024 * 1024        # keep the Kronecker matrix resident


@jax.jit
def up_bilinear_2x(x):
    """Bilinear 2x upsample, align_corners=True.  x: (N, C, H, W)."""
    N, C, H, W = x.shape
    Hout, Wout = 2 * H, 2 * W
    B = N * C
    in_b = x.dtype.itemsize
    out_dtype = x.dtype

    wy = _interp_matrix(Hout, H)        # (Hout, H) f32
    wx = _interp_matrix(Wout, W)        # (Wout, W) f32

    kt_bytes = (H * W) * (Hout * Wout) * 4
    io_bytes = B * H * W * in_b * 5     # read + 4x write (memory-bound op)
    vmem_limit = 32 * 1024 * 1024       # safe on v5e/v6e (128 MiB) and v7x (64 MiB)

    if kt_bytes <= _KRON_KT_LIMIT:
        # ---------- fused single-matmul path (small spatial maps) ----------
        per_slice = (2 * H * W * in_b            # input block (double-buffered)
                     + 2 * Hout * Wout * in_b    # output block (double-buffered)
                     + Hout * Wout * 4           # f32 matmul result
                     + H * W * 4)                # f32 cast of x
        tb = _pick_tb(B, per_slice, _VMEM_BLOCK_BUDGET)
        g = B // tb
        kt = jnp.einsum("oh,pw->hwop", wy, wx).reshape(H * W, Hout * Wout)
        x3 = x.reshape(g, tb, H * W)
        cost = pl.CostEstimate(flops=2 * B * (H * W) * (Hout * Wout),
                               transcendentals=0,
                               bytes_accessed=int(io_bytes + kt_bytes))
        out = pl.pallas_call(
            _kron_upsample_kernel,
            out_shape=jax.ShapeDtypeStruct((g, tb, Hout * Wout), out_dtype),
            grid=(g,),
            in_specs=[
                pl.BlockSpec((H * W, Hout * Wout), lambda i: (0, 0)),  # resident
                pl.BlockSpec((1, tb, H * W), lambda i: (i, 0, 0)),
            ],
            out_specs=pl.BlockSpec((1, tb, Hout * Wout), lambda i: (i, 0, 0)),
            compiler_params=pltpu.CompilerParams(
                dimension_semantics=("parallel",),
                vmem_limit_bytes=vmem_limit),
            cost_estimate=cost,
        )(kt, x3)
        return out.reshape(N, C, Hout, Wout)

    # ---------- general separable path (larger spatial maps) ----------
    per_slice = (2 * H * W * in_b                # input block (double-buffered)
                 + 2 * Hout * Wout * in_b        # output block (double-buffered)
                 + Hout * W * 4                  # f32 stage-1 temp
                 + Hout * Wout * 4               # f32 stage-2 temp
                 + H * W * 4                     # f32 cast of x
                 + Hout * H * 4)                 # broadcast wy share
    tb = _pick_tb(B, per_slice, _VMEM_BLOCK_BUDGET)
    g = B // tb
    wxt = wx.T                                    # (W, Wout)
    x3 = x.reshape(B, H, W)
    cost = pl.CostEstimate(
        flops=2 * B * (Hout * H * W + Hout * W * Wout),
        transcendentals=0,
        bytes_accessed=int(io_bytes))
    out = pl.pallas_call(
        _separable_upsample_kernel,
        out_shape=jax.ShapeDtypeStruct((B, Hout, Wout), out_dtype),
        grid=(g,),
        in_specs=[
            pl.BlockSpec((Hout, H), lambda i: (0, 0)),     # resident
            pl.BlockSpec((W, Wout), lambda i: (0, 0)),     # resident
            pl.BlockSpec((tb, H, W), lambda i: (i, 0, 0)),
        ],
        out_specs=pl.BlockSpec((tb, Hout, Wout), lambda i: (i, 0, 0)),
        compiler_params=pltpu.CompilerParams(
            dimension_semantics=("parallel",),
            vmem_limit_bytes=vmem_limit),
        cost_estimate=cost,
    )(wy, wxt, x3)
    return out.reshape(N, C, Hout, Wout)


if __name__ == "__main__":
    key = jax.random.PRNGKey(0)

    def _reference(x):
        N, C, H, W = x.shape
        wy = _interp_matrix(2 * H, H)
        wxt = _interp_matrix(2 * W, W).T
        ref = jnp.einsum("oh,bhw,wt->bot", wy,
                         x.reshape(N * C, H, W).astype(jnp.float32), wxt)
        return ref.reshape(N, C, 2 * H, 2 * W).astype(x.dtype)

    k1, k2 = jax.random.split(key)

    # Test 1: spec shape (2, 4, 16, 16) -> fused Kronecker single-matmul path.
    x1 = jax.random.normal(k1, (2, 4, 16, 16), dtype=jnp.float32)
    out1 = jax.block_until_ready(up_bilinear_2x(x1))
    assert out1.shape == (2, 4, 32, 32), out1.shape
    assert jnp.allclose(out1, _reference(x1), atol=1e-4, rtol=1e-4)

    # Test 2: larger feature map (W >= 64) -> general separable path.
    x2 = jax.random.normal(k2, (1, 16, 16, 128), dtype=jnp.float32)
    out2 = jax.block_until_ready(up_bilinear_2x(x2))
    assert out2.shape == (1, 16, 32, 256), out2.shape
    assert jnp.allclose(out2, _reference(x2), atol=1e-4, rtol=1e-4)

    print("KERNEL_OK")
</pallas_src>

<mosaic_0001>
module attributes {stable_mosaic.version = 11 : i64} {
  func.func @_kron_upsample_kernel(%arg0: i32, %arg1: memref<256x1024xf32, #tpu.memory_space<vmem>>, %arg2: memref<1x4x256xf32, #tpu.memory_space<vmem>>, %arg3: memref<1x4x1024xf32, #tpu.memory_space<vmem>>) attributes {dimension_semantics = [#tpu.dimension_semantics<parallel>], iteration_bounds = array<i64: 2>, scalar_prefetch = 0 : i64, scratch_operands = 0 : i64, tpu.core_type = #tpu.core_type<tc>, window_params = [{pipeline_mode = #tpu.pipeline_mode<synchronous>, transform_indices = @transform_0, window_bounds = array<i64: 256, 1024>}, {transform_indices = @transform_1, window_bounds = array<i64: 1, 4, 256>}, {transform_indices = @transform_2, window_bounds = array<i64: 1, 4, 1024>}]} {
    %c0 = arith.constant 0 : index
    %c0_0 = arith.constant 0 : index
    %c0_1 = arith.constant 0 : index
    %0 = vector.load %arg2[%c0, %c0_0, %c0_1] : memref<1x4x256xf32, #tpu.memory_space<vmem>>, vector<1x4x256xf32>
    %1 = vector.shape_cast %0 : vector<1x4x256xf32> to vector<4x256xf32>
    %c0_2 = arith.constant 0 : index
    %c0_3 = arith.constant 0 : index
    %2 = vector.load %arg1[%c0_2, %c0_3] : memref<256x1024xf32, #tpu.memory_space<vmem>>, vector<256x1024xf32>
    %cst = arith.constant dense<0.000000e+00> : vector<4x1024xf32>
    %3 = tpu.matmul %1, %2, %cst {dimension_numbers = #tpu.dot_dimension_numbers<[1], [0], [0], [1], [0, 0, 1, 1], [], []>} : vector<4x256xf32>, vector<256x1024xf32>, vector<4x1024xf32> -> vector<4x1024xf32>
    %c0_4 = arith.constant 0 : index
    %c0_5 = arith.constant 0 : index
    %c0_6 = arith.constant 0 : index
    %4 = vector.load %arg3[%c0_4, %c0_5, %c0_6] : memref<1x4x1024xf32, #tpu.memory_space<vmem>>, vector<1x4x1024xf32>
    %5 = vector.shape_cast %4 : vector<1x4x1024xf32> to vector<4x1024xf32>
    %6 = vector.shape_cast %3 : vector<4x1024xf32> to vector<1x4x1024xf32>
    tpu.vector_store %arg3[%c0_4, %c0_5, %c0_6], %6 {strides = array<i32>} : memref<1x4x1024xf32, #tpu.memory_space<vmem>>, vector<1x4x1024xf32>,
    return
  }
  func.func @transform_0(%arg0: i32) -> (i32, i32) {
    %c0_i32 = arith.constant 0 : i32
    %c0_i32_0 = arith.constant 0 : i32
    %c0_i32_1 = arith.constant 0 : i32
    return %c0_i32, %c0_i32_0 : i32, i32
  }
  func.func @transform_1(%arg0: i32) -> (i32, i32, i32) {
    %c0_i32 = arith.constant 0 : i32
    %c0_i32_0 = arith.constant 0 : i32
    %c0_i32_1 = arith.constant 0 : i32
    return %arg0, %c0_i32, %c0_i32_0 : i32, i32, i32
  }
  func.func @transform_2(%arg0: i32) -> (i32, i32, i32) {
    %c0_i32 = arith.constant 0 : i32
    %c0_i32_0 = arith.constant 0 : i32
    %c0_i32_1 = arith.constant 0 : i32
    return %arg0, %c0_i32, %c0_i32_0 : i32, i32, i32
  }
}

</mosaic_0001>

<llo_original>
// kernel: up_bilinear_2x.1
$region0: #{up_bilinear_2x.1}
  #allocation0 [shape = 'u32[]', space=smem, size = 0x4, offset = 0x4, fixed_abs, tag = 'smem constant byte address 0x4 - core index']
  #allocation1 [shape = 'u32[144,128]{1,0:T(1,128)}', space=vmem, size = 0x12000, scoped, tag = 'internal scratch']
  %s0 = inlined_call_operand.vmem [shape: f32[256,1024], index: 0, kind: input, shape index: {}]
  %s1 = inlined_call_operand.vmem [shape: f32[2,4,256], index: 1, kind: input, shape index: {}]
  %s2 = inlined_call_operand.vmem [shape: f32[2,4,1024], index: 2, kind: output, shape index: {}]
  %s3 = sld [smem:[#allocation0]]
  $region41: #{up_bilinear_2x.1} parent=0
    _
  %s5 = ssub.s32 1, %s3
  %s6 = scalar_select 0, %s5, %s3
  loop: start=0, step=1, limit=4
  $region2: #{up_bilinear_2x.1} parent=0 // loop_pre_header
    _
  $region3: #{up_bilinear_2x.1} parent=0 // loop_header
    %s8 = sphi 0, %s12
    %p9 = scmp.ge.s32.totalorder %s8, 4
    %s16 = sphi 0, %s16
    %s18 = sphi 0, %s16
    %s19 = sphi 0, %s18
    %s33 = sphi 0, %s19
    %s39 = sphi 0, %s41
    %s42 = sphi 0, %s39
    %s43 = sphi 0, %s42
    %s59 = sphi 0, %s43
    %s65 = sphi 0, %s67
    %s68 = sphi 0, %s65
    %s69 = sphi 0, %s68
    %s85 = sphi 0, %s69
  $region4: #{up_bilinear_2x.1} parent=0 // loop_header_branch
    %11 = sbr.rel (%p9) target = $region8
  $region5: #{up_bilinear_2x.1} parent=0 // loop_body
    %s13 = ssub.s32 %s8, 1
    %s14 = ssub.s32 %s8, 2
    %s15 = sadd.s32 %s8, 1
    %s17 = sadd.s32 %s16, 1
    %p20 = scmp.eq.s32.totalorder %s8, 1
    %p21 = scmp.ne.s32.totalorder %s16, %s18
    %p22 = scmp.eq.s32.totalorder %s8, 0
    %p23 = por %p21, %p22
    %p24 = scmp.ne.s32.totalorder %s16, %s18
    %p25 = scmp.eq.s32.totalorder %s13, 1
    %p26 = por %p24, %p25
    %p27 = scmp.ne.s32.totalorder %s18, %s19
    %p28 = scmp.eq.s32.totalorder %s13, 0
    %p29 = por %p27, %p28
    %p30 = scmp.ne.s32.totalorder %s18, %s19
    %p31 = scmp.eq.s32.totalorder %s14, 1
    %p32 = por %p30, %p31
    %p34 = scmp.ne.s32.totalorder %s19, %s33
    %p35 = scmp.eq.s32.totalorder %s14, 0
    %p36 = por %p34, %p35
    %s37 = ssub.s32 %s8, %s15
    %p38 = scmp.eq.s32.totalorder %s37, 0
    %s40 = sadd.s32 %s39, 1
    %s41 = scalar_select %p38, %s39, %s40
    %p44 = pneg %p38
    %p45 = scmp.eq.s32.totalorder %s8, 1
    %p46 = por %p44, %p45
    %p47 = scmp.ne.s32.totalorder %s39, %s42
    %p48 = scmp.eq.s32.totalorder %s8, 0
    %p49 = por %p47, %p48
    %p50 = scmp.ne.s32.totalorder %s39, %s42
    %p51 = scmp.eq.s32.totalorder %s13, 1
    %p52 = por %p50, %p51
    %p53 = scmp.ne.s32.totalorder %s42, %s43
    %p54 = scmp.eq.s32.totalorder %s13, 0
    %p55 = por %p53, %p54
    %p56 = scmp.ne.s32.totalorder %s42, %s43
    %p57 = scmp.eq.s32.totalorder %s14, 1
    %p58 = por %p56, %p57
    %p60 = scmp.ne.s32.totalorder %s43, %s59
    %p61 = scmp.eq.s32.totalorder %s14, 0
    %p62 = por %p60, %p61
    %s63 = ssub.s32 %s8, %s15
    %p64 = scmp.eq.s32.totalorder %s63, 0
    %s66 = sadd.s32 %s65, 1
    %s67 = scalar_select %p64, %s65, %s66
    %p70 = pneg %p64
    %p71 = scmp.eq.s32.totalorder %s8, 1
    %p72 = por %p70, %p71
    %p73 = scmp.ne.s32.totalorder %s65, %s68
    %p74 = scmp.eq.s32.totalorder %s8, 0
    %p75 = por %p73, %p74
    %p76 = scmp.ne.s32.totalorder %s65, %s68
    %p77 = scmp.eq.s32.totalorder %s13, 1
    %p78 = por %p76, %p77
    %p79 = scmp.ne.s32.totalorder %s68, %s69
    %p80 = scmp.eq.s32.totalorder %s13, 0
    %p81 = por %p79, %p80
    %p82 = scmp.ne.s32.totalorder %s68, %s69
    %p83 = scmp.eq.s32.totalorder %s14, 1
    %p84 = por %p82, %p83
    %p86 = scmp.ne.s32.totalorder %s69, %s85
    %p87 = scmp.eq.s32.totalorder %s14, 0
    %p88 = por %p86, %p87
    %p89 = scmp.le.s32.totalorder 1, %s8
    %p90 = scmp.lt.s32.totalorder %s8, 3
    %p91 = pnand %p89, %p90
    %p92 = pneg %p91
    // Predicated region
    $region9: #{up_bilinear_2x.1} parent=5 // pred_check
      _
    $region10: #{up_bilinear_2x.1} parent=5 // pred_check_branch
      %94 = sbr.rel (%p91) target = $region12
    $region11: #{up_bilinear_2x.1} parent=5 // pred_region
      %s95 = ssub.s32 %s8, 1
      // Predicated region
      $region13: #{up_bilinear_2x.1} parent=11 // pred_check
        %p96 = pneg %p29
      $region14: #{up_bilinear_2x.1} parent=11 // pred_check_branch
        %98 = sbr.rel (%p96) target = $region16
      $region15: #{up_bilinear_2x.1} parent=11 // pred_region
        _
      $region16: #{up_bilinear_2x.1} parent=11 // pred_fallthru
        _
    $region12: #{up_bilinear_2x.1} parent=5 // pred_fallthru
      _
    %p99 = scmp.lt.s32.totalorder %s8, 2
    // Predicated region
    $region17: #{up_bilinear_2x.1} parent=5 // pred_check
      %p100 = pneg %p99
    $region18: #{up_bilinear_2x.1} parent=5 // pred_check_branch
      %102 = sbr.rel (%p100) target = $region20
    $region19: #{up_bilinear_2x.1} parent=5 // pred_region
      // Predicated region
      $region21: #{up_bilinear_2x.1} parent=19 // pred_check
        %p103 = pneg %p49
      $region22: #{up_bilinear_2x.1} parent=19 // pred_check_branch
        %105 = sbr.rel (%p103) target = $region24
      $region23: #{up_bilinear_2x.1} parent=19 // pred_region
        %p106 = scmp.lt.s32.totalorder %s8, 1
        %s107 = scalar_select %p106, %s8, 1
        %s108 = smul.addr %s107, 2
        %s109 = smul.addr %s108, 4
        %s110 = scalar_lea.vmem %s1, %s109
      $region24: #{up_bilinear_2x.1} parent=19 // pred_fallthru
        _
    $region20: #{up_bilinear_2x.1} parent=5 // pred_fallthru
      _
    %p111 = scmp.le.s32.totalorder 1, %s8
    %p112 = scmp.lt.s32.totalorder %s8, 3
    %p113 = pnand %p111, %p112
    %p114 = pneg %p113
    // Predicated region
    $region25: #{up_bilinear_2x.1} parent=5 // pred_check
      _
    $region26: #{up_bilinear_2x.1} parent=5 // pred_check_branch
      %116 = sbr.rel (%p113) target = $region28
    $region27: #{up_bilinear_2x.1} parent=5 // pred_region
      %s117 = ssub.s32 %s8, 1
      %p118 = pneg %p29
      %p119 = pneg %p26
      %p120 = scmp.lt.s32.totalorder %s13, 1
      %s121 = scalar_select %p120, %s13, 1
      %s122 = smul.addr %s121, 2
      %s123 = smul.addr %s122, 4
      %s124 = scalar_lea.vmem %s1, %s123
      %p125 = pneg %p55
      %p126 = pneg %p52
      %p127 = pneg %p81
      %p128 = pneg %p78
      %p129 = scmp.lt.s32.totalorder %s13, 1
      %s130 = scalar_select %p129, %s13, 1
      %s131 = smul.addr %s130, 8
      %s132 = smul.addr %s131, 4
      %s133 = scalar_lea.vmem %s2, %s132
      %p134 = scmp.lt.s32.totalorder %s13, 1
      %s135 = scalar_select %p134, %s13, 1
      %s136 = smul.addr %s135, 2
      %s137 = smul.addr %s136, 4
      %s138 = scalar_lea.vmem %s1, %s137
      %p139 = scmp.lt.s32.totalorder %s13, 1
      %s140 = scalar_select %p139, %s13, 1
      %s141 = smul.addr %s140, 8
      %s142 = smul.addr %s141, 4
      %s143 = scalar_lea.vmem %s2, %s142
      %v144 = vld [vmem:[%s138] sm:$0xff]
      %v145 = vld [vmem:[%s0] sm:$0xff]
      %v146 = vld [vmem:[%s0 + $0x8] sm:$0xff]
      %v147 = vld [vmem:[%s0 + $0x10] sm:$0xff]
      %v148 = vld [vmem:[%s0 + $0x18] sm:$0xff]
      %v149 = vld [vmem:[%s0 + $0x20] sm:$0xff]
      %v150 = vld [vmem:[%s0 + $0x28] sm:$0xff]
      %v151 = vld [vmem:[%s0 + $0x30] sm:$0xff]
      %v152 = vld [vmem:[%s0 + $0x38] sm:$0xff]
      %v153 = vld [vmem:[%s0 + $0x40] sm:$0xff]
      %v154 = vld [vmem:[%s0 + $0x48] sm:$0xff]
      %v155 = vld [vmem:[%s0 + $0x50] sm:$0xff]
      %v156 = vld [vmem:[%s0 + $0x58] sm:$0xff]
      %v157 = vld [vmem:[%s0 + $0x60] sm:$0xff]
      %v158 = vld [vmem:[%s0 + $0x68] sm:$0xff]
      %v159 = vld [vmem:[%s0 + $0x70] sm:$0xff]
      %v160 = vld [vmem:[%s0 + $0x78] sm:$0xff]
      %v161 = vld [vmem:[%s0 + $0x80] sm:$0xff]
      %v162 = vld [vmem:[%s0 + $0x88] sm:$0xff]
      %v163 = vld [vmem:[%s0 + $0x90] sm:$0xff]
      %v164 = vld [vmem:[%s0 + $0x98] sm:$0xff]
      %v165 = vld [vmem:[%s0 + $0xa0] sm:$0xff]
      %v166 = vld [vmem:[%s0 + $0xa8] sm:$0xff]
      %v167 = vld [vmem:[%s0 + $0xb0] sm:$0xff]
      %v168 = vld [vmem:[%s0 + $0xb8] sm:$0xff]
      %v169 = vld [vmem:[%s0 + $0xc0] sm:$0xff]
      %v170 = vld [vmem:[%s0 + $0xc8] sm:$0xff]
      %v171 = vld [vmem:[%s0 + $0xd0] sm:$0xff]
      %v172 = vld [vmem:[%s0 + $0xd8] sm:$0xff]
      %v173 = vld [vmem:[%s0 + $0xe0] sm:$0xff]
      %v174 = vld [vmem:[%s0 + $0xe8] sm:$0xff]
      %v175 = vld [vmem:[%s0 + $0xf0] sm:$0xff]
      %v176 = vld [vmem:[%s0 + $0xf8] sm:$0xff]
      %v177 = vld [vmem:[%s0 + $0x100] sm:$0xff]
      %v178 = vld [vmem:[%s0 + $0x108] sm:$0xff]
      %v179 = vld [vmem:[%s0 + $0x110] sm:$0xff]
      %v180 = vld [vmem:[%s0 + $0x118] sm:$0xff]
      %v181 = vld [vmem:[%s0 + $0x120] sm:$0xff]
      %v182 = vld [vmem:[%s0 + $0x128] sm:$0xff]
      %v183 = vld [vmem:[%s0 + $0x130] sm:$0xff]
      %v184 = vld [vmem:[%s0 + $0x138] sm:$0xff]
      %v185 = vld [vmem:[%s0 + $0x140] sm:$0xff]
      %v186 = vld [vmem:[%s0 + $0x148] sm:$0xff]
      %v187 = vld [vmem:[%s0 + $0x150] sm:$0xff]
      %v188 = vld [vmem:[%s0 + $0x158] sm:$0xff]
      %v189 = vld [vmem:[%s0 + $0x160] sm:$0xff]
      %v190 = vld [vmem:[%s0 + $0x168] sm:$0xff]
      %v191 = vld [vmem:[%s0 + $0x170] sm:$0xff]
      %v192 = vld [vmem:[%s0 + $0x178] sm:$0xff]
      %v193 = vld [vmem:[%s0 + $0x180] sm:$0xff]
      %v194 = vld [vmem:[%s0 + $0x188] sm:$0xff]
      %v195 = vld [vmem:[%s0 + $0x190] sm:$0xff]
      %v196 = vld [vmem:[%s0 + $0x198] sm:$0xff]
      %v197 = vld [vmem:[%s0 + $0x1a0] sm:$0xff]
      %v198 = vld [vmem:[%s0 + $0x1a8] sm:$0xff]
      %v199 = vld [vmem:[%s0 + $0x1b0] sm:$0xff]
      %v200 = vld [vmem:[%s0 + $0x1b8] sm:$0xff]
      %v201 = vld [vmem:[%s0 + $0x1c0] sm:$0xff]
      %v202 = vld [vmem:[%s0 + $0x1c8] sm:$0xff]
      %v203 = vld [vmem:[%s0 + $0x1d0] sm:$0xff]
      %v204 = vld [vmem:[%s0 + $0x1d8] sm:$0xff]
      %v205 = vld [vmem:[%s0 + $0x1e0] sm:$0xff]
      %v206 = vld [vmem:[%s0 + $0x1e8] sm:$0xff]
      %v207 = vld [vmem:[%s0 + $0x1f0] sm:$0xff]
      %v208 = vld [vmem:[%s0 + $0x1f8] sm:$0xff]
      %v209 = vld [vmem:[%s0 + $0x200] sm:$0xff]
      %v210 = vld [vmem:[%s0 + $0x208] sm:$0xff]
      %v211 = vld [vmem:[%s0 + $0x210] sm:$0xff]
      %v212 = vld [vmem:[%s0 + $0x218] sm:$0xff]
      %v213 = vld [vmem:[%s0 + $0x220] sm:$0xff]
      %v214 = vld [vmem:[%s0 + $0x228] sm:$0xff]
      %v215 = vld [vmem:[%s0 + $0x230] sm:$0xff]
      %v216 = vld [vmem:[%s0 + $0x238] sm:$0xff]
      %v217 = vld [vmem:[%s0 + $0x240] sm:$0xff]
      %v218 = vld [vmem:[%s0 + $0x248] sm:$0xff]
      %v219 = vld [vmem:[%s0 + $0x250] sm:$0xff]
      %v220 = vld [vmem:[%s0 + $0x258] sm:$0xff]
      %v221 = vld [vmem:[%s0 + $0x260] sm:$0xff]
      %v222 = vld [vmem:[%s0 + $0x268] sm:$0xff]
      %v223 = vld [vmem:[%s0 + $0x270] sm:$0xff]
      %v224 = vld [vmem:[%s0 + $0x278] sm:$0xff]
      %v225 = vld [vmem:[%s0 + $0x280] sm:$0xff]
      %v226 = vld [vmem:[%s0 + $0x288] sm:$0xff]
      %v227 = vld [vmem:[%s0 + $0x290] sm:$0xff]
      %v228 = vld [vmem:[%s0 + $0x298] sm:$0xff]
      %v229 = vld [vmem:[%s0 + $0x2a0] sm:$0xff]
      %v230 = vld [vmem:[%s0 + $0x2a8] sm:$0xff]
      %v231 = vld [vmem:[%s0 + $0x2b0] sm:$0xff]
      %v232 = vld [vmem:[%s0 + $0x2b8] sm:$0xff]
      %v233 = vld [vmem:[%s0 + $0x2c0] sm:$0xff]
      %v234 = vld [vmem:[%s0 + $0x2c8] sm:$0xff]
      %v235 = vld [vmem:[%s0 + $0x2d0] sm:$0xff]
      %v236 = vld [vmem:[%s0 + $0x2d8] sm:$0xff]
      %v237 = vld [vmem:[%s0 + $0x2e0] sm:$0xff]
      %v238 = vld [vmem:[%s0 + $0x2e8] sm:$0xff]
      %v239 = vld [vmem:[%s0 + $0x2f0] sm:$0xff]
      %v240 = vld [vmem:[%s0 + $0x2f8] sm:$0xff]
      %v241 = vld [vmem:[%s0 + $0x300] sm:$0xff]
      %v242 = vld [vmem:[%s0 + $0x308] sm:$0xff]
      %v243 = vld [vmem:[%s0 + $0x310] sm:$0xff]
      %v244 = vld [vmem:[%s0 + $0x318] sm:$0xff]
      %v245 = vld [vmem:[%s0 + $0x320] sm:$0xff]
      %v246 = vld [vmem:[%s0 + $0x328] sm:$0xff]
      %v247 = vld [vmem:[%s0 + $0x330] sm:$0xff]
      %v248 = vld [vmem:[%s0 + $0x338] sm:$0xff]
      %v249 = vld [vmem:[%s0 + $0x340] sm:$0xff]
      %v250 = vld [vmem:[%s0 + $0x348] sm:$0xff]
      %v251 = vld [vmem:[%s0 + $0x350] sm:$0xff]
      %v252 = vld [vmem:[%s0 + $0x358] sm:$0xff]
      %v253 = vld [vmem:[%s0 + $0x360] sm:$0xff]
      %v254 = vld [vmem:[%s0 + $0x368] sm:$0xff]
      %v255 = vld [vmem:[%s0 + $0x370] sm:$0xff]
      %v256 = vld [vmem:[%s0 + $0x378] sm:$0xff]
      %v257 = vld [vmem:[%s0 + $0x380] sm:$0xff]
      %v258 = vld [vmem:[%s0 + $0x388] sm:$0xff]
      %v259 = vld [vmem:[%s0 + $0x390] sm:$0xff]
      %v260 = vld [vmem:[%s0 + $0x398] sm:$0xff]
      %v261 = vld [vmem:[%s0 + $0x3a0] sm:$0xff]
      %v262 = vld [vmem:[%s0 + $0x3a8] sm:$0xff]
      %v263 = vld [vmem:[%s0 + $0x3b0] sm:$0xff]
      %v264 = vld [vmem:[%s0 + $0x3b8] sm:$0xff]
      %v265 = vld [vmem:[%s0 + $0x3c0] sm:$0xff]
      %v266 = vld [vmem:[%s0 + $0x3c8] sm:$0xff]
      %v267 = vld [vmem:[%s0 + $0x3d0] sm:$0xff]
      %v268 = vld [vmem:[%s0 + $0x3d8] sm:$0xff]
      %v269 = vld [vmem:[%s0 + $0x3e0] sm:$0xff]
      %v270 = vld [vmem:[%s0 + $0x3e8] sm:$0xff]
      %v271 = vld [vmem:[%s0 + $0x3f0] sm:$0xff]
      %v272 = vld [vmem:[%s0 + $0x3f8] sm:$0xff]
      %v273 = vld [vmem:[%s0 + $0x400] sm:$0xff]
      %v274 = vld [vmem:[%s0 + $0x408] sm:$0xff]
      %v275 = vld [vmem:[%s0 + $0x410] sm:$0xff]
      %v276 = vld [vmem:[%s0 + $0x418] sm:$0xff]
      %v277 = vld [vmem:[%s0 + $0x420] sm:$0xff]
      %v278 = vld [vmem:[%s0 + $0x428] sm:$0xff]
      %v279 = vld [vmem:[%s0 + $0x430] sm:$0xff]
      %v280 = vld [vmem:[%s0 + $0x438] sm:$0xff]
      %v281 = vld [vmem:[%s0 + $0x440] sm:$0xff]
      %v282 = vld [vmem:[%s0 + $0x448] sm:$0xff]
      %v283 = vld [vmem:[%s0 + $0x450] sm:$0xff]
      %v284 = vld [vmem:[%s0 + $0x458] sm:$0xff]
      %v285 = vld [vmem:[%s0 + $0x460] sm:$0xff]
      %v286 = vld [vmem:[%s0 + $0x468] sm:$0xff]
      %v287 = vld [vmem:[%s0 + $0x470] sm:$0xff]
      %v288 = vld [vmem:[%s0 + $0x478] sm:$0xff]
      %v289 = vld [vmem:[%s0 + $0x480] sm:$0xff]
      %v290 = vld [vmem:[%s0 + $0x488] sm:$0xff]
      %v291 = vld [vmem:[%s0 + $0x490] sm:$0xff]
      %v292 = vld [vmem:[%s0 + $0x498] sm:$0xff]
      %v293 = vld [vmem:[%s0 + $0x4a0] sm:$0xff]
      %v294 = vld [vmem:[%s0 + $0x4a8] sm:$0xff]
      %v295 = vld [vmem:[%s0 + $0x4b0] sm:$0xff]
      %v296 = vld [vmem:[%s0 + $0x4b8] sm:$0xff]
      %v297 = vld [vmem:[%s0 + $0x4c0] sm:$0xff]
      %v298 = vld [vmem:[%s0 + $0x4c8] sm:$0xff]
      %v299 = vld [vmem:[%s0 + $0x4d0] sm:$0xff]
      %v300 = vld [vmem:[%s0 + $0x4d8] sm:$0xff]
      %v301 = vld [vmem:[%s0 + $0x4e0] sm:$0xff]
      %v302 = vld [vmem:[%s0 + $0x4e8] sm:$0xff]
      %v303 = vld [vmem:[%s0 + $0x4f0] sm:$0xff]
      %v304 = vld [vmem:[%s0 + $0x4f8] sm:$0xff]
      %v305 = vld [vmem:[%s0 + $0x500] sm:$0xff]
      %v306 = vld [vmem:[%s0 + $0x508] sm:$0xff]
      %v307 = vld [vmem:[%s0 + $0x510] sm:$0xff]
      %v308 = vld [vmem:[%s0 + $0x518] sm:$0xff]
      %v309 = vld [vmem:[%s0 + $0x520] sm:$0xff]
      %v310 = vld [vmem:[%s0 + $0x528] sm:$0xff]
      %v311 = vld [vmem:[%s0 + $0x530] sm:$0xff]
      %v312 = vld [vmem:[%s0 + $0x538] sm:$0xff]
      %v313 = vld [vmem:[%s0 + $0x540] sm:$0xff]
      %v314 = vld [vmem:[%s0 + $0x548] sm:$0xff]
      %v315 = vld [vmem:[%s0 + $0x550] sm:$0xff]
      %v316 = vld [vmem:[%s0 + $0x558] sm:$0xff]
      %v317 = vld [vmem:[%s0 + $0x560] sm:$0xff]
      %v318 = vld [vmem:[%s0 + $0x568] sm:$0xff]
      %v319 = vld [vmem:[%s0 + $0x570] sm:$0xff]
      %v320 = vld [vmem:[%s0 + $0x578] sm:$0xff]
      %v321 = vld [vmem:[%s0 + $0x580] sm:$0xff]
      %v322 = vld [vmem:[%s0 + $0x588] sm:$0xff]
      %v323 = vld [vmem:[%s0 + $0x590] sm:$0xff]
      %v324 = vld [vmem:[%s0 + $0x598] sm:$0xff]
      %v325 = vld [vmem:[%s0 + $0x5a0] sm:$0xff]
      %v326 = vld [vmem:[%s0 + $0x5a8] sm:$0xff]
      %v327 = vld [vmem:[%s0 + $0x5b0] sm:$0xff]
      %v328 = vld [vmem:[%s0 + $0x5b8] sm:$0xff]
      %v329 = vld [vmem:[%s0 + $0x5c0] sm:$0xff]
      %v330 = vld [vmem:[%s0 + $0x5c8] sm:$0xff]
      %v331 = vld [vmem:[%s0 + $0x5d0] sm:$0xff]
      %v332 = vld [vmem:[%s0 + $0x5d8] sm:$0xff]
      %v333 = vld [vmem:[%s0 + $0x5e0] sm:$0xff]
      %v334 = vld [vmem:[%s0 + $0x5e8] sm:$0xff]
      %v335 = vld [vmem:[%s0 + $0x5f0] sm:$0xff]
      %v336 = vld [vmem:[%s0 + $0x5f8] sm:$0xff]
      %v337 = vld [vmem:[%s0 + $0x600] sm:$0xff]
      %v338 = vld [vmem:[%s0 + $0x608] sm:$0xff]
      %v339 = vld [vmem:[%s0 + $0x610] sm:$0xff]
      %v340 = vld [vmem:[%s0 + $0x618] sm:$0xff]
      %v341 = vld [vmem:[%s0 + $0x620] sm:$0xff]
      %v342 = vld [vmem:[%s0 + $0x628] sm:$0xff]
      %v343 = vld [vmem:[%s0 + $0x630] sm:$0xff]
      %v344 = vld [vmem:[%s0 + $0x638] sm:$0xff]
      %v345 = vld [vmem:[%s0 + $0x640] sm:$0xff]
      %v346 = vld [vmem:[%s0 + $0x648] sm:$0xff]
      %v347 = vld [vmem:[%s0 + $0x650] sm:$0xff]
      %v348 = vld [vmem:[%s0 + $0x658] sm:$0xff]
      %v349 = vld [vmem:[%s0 + $0x660] sm:$0xff]
      %v350 = vld [vmem:[%s0 + $0x668] sm:$0xff]
      %v351 = vld [vmem:[%s0 + $0x670] sm:$0xff]
      %v352 = vld [vmem:[%s0 + $0x678] sm:$0xff]
      %v353 = vld [vmem:[%s0 + $0x680] sm:$0xff]
      %v354 = vld [vmem:[%s0 + $0x688] sm:$0xff]
      %v355 = vld [vmem:[%s0 + $0x690] sm:$0xff]
      %v356 = vld [vmem:[%s0 + $0x698] sm:$0xff]
      %v357 = vld [vmem:[%s0 + $0x6a0] sm:$0xff]
      %v358 = vld [vmem:[%s0 + $0x6a8] sm:$0xff]
      %v359 = vld [vmem:[%s0 + $0x6b0] sm:$0xff]
      %v360 = vld [vmem:[%s0 + $0x6b8] sm:$0xff]
      %v361 = vld [vmem:[%s0 + $0x6c0] sm:$0xff]
      %v362 = vld [vmem:[%s0 + $0x6c8] sm:$0xff]
      %v363 = vld [vmem:[%s0 + $0x6d0] sm:$0xff]
      %v364 = vld [vmem:[%s0 + $0x6d8] sm:$0xff]
      %v365 = vld [vmem:[%s0 + $0x6e0] sm:$0xff]
      %v366 = vld [vmem:[%s0 + $0x6e8] sm:$0xff]
      %v367 = vld [vmem:[%s0 + $0x6f0] sm:$0xff]
      %v368 = vld [vmem:[%s0 + $0x6f8] sm:$0xff]
      %v369 = vld [vmem:[%s0 + $0x700] sm:$0xff]
      %v370 = vld [vmem:[%s0 + $0x708] sm:$0xff]
      %v371 = vld [vmem:[%s0 + $0x710] sm:$0xff]
      %v372 = vld [vmem:[%s0 + $0x718] sm:$0xff]
      %v373 = vld [vmem:[%s0 + $0x720] sm:$0xff]
      %v374 = vld [vmem:[%s0 + $0x728] sm:$0xff]
      %v375 = vld [vmem:[%s0 + $0x730] sm:$0xff]
      %v376 = vld [vmem:[%s0 + $0x738] sm:$0xff]
      %v377 = vld [vmem:[%s0 + $0x740] sm:$0xff]
      %v378 = vld [vmem:[%s0 + $0x748] sm:$0xff]
      %v379 = vld [vmem:[%s0 + $0x750] sm:$0xff]
      %v380 = vld [vmem:[%s0 + $0x758] sm:$0xff]
      %v381 = vld [vmem:[%s0 + $0x760] sm:$0xff]
      %v382 = vld [vmem:[%s0 + $0x768] sm:$0xff]
      %v383 = vld [vmem:[%s0 + $0x770] sm:$0xff]
      %v384 = vld [vmem:[%s0 + $0x778] sm:$0xff]
      %v385 = vld [vmem:[%s0 + $0x780] sm:$0xff]
      %v386 = vld [vmem:[%s0 + $0x788] sm:$0xff]
      %v387 = vld [vmem:[%s0 + $0x790] sm:$0xff]
      %v388 = vld [vmem:[%s0 + $0x798] sm:$0xff]
      %v389 = vld [vmem:[%s0 + $0x7a0] sm:$0xff]
      %v390 = vld [vmem:[%s0 + $0x7a8] sm:$0xff]
      %v391 = vld [vmem:[%s0 + $0x7b0] sm:$0xff]
      %v392 = vld [vmem:[%s0 + $0x7b8] sm:$0xff]
      %v393 = vld [vmem:[%s0 + $0x7c0] sm:$0xff]
      %v394 = vld [vmem:[%s0 + $0x7c8] sm:$0xff]
      %v395 = vld [vmem:[%s0 + $0x7d0] sm:$0xff]
      %v396 = vld [vmem:[%s0 + $0x7d8] sm:$0xff]
      %v397 = vld [vmem:[%s0 + $0x7e0] sm:$0xff]
      %v398 = vld [vmem:[%s0 + $0x7e8] sm:$0xff]
      %v399 = vld [vmem:[%s0 + $0x7f0] sm:$0xff]
      %v400 = vld [vmem:[%s0 + $0x7f8] sm:$0xff]
      %v402 = vcombine.high %v144, %v144
      %404 = vmatprep.subr.mxu0 %v266
      %405 = vmatpush1.msra.mxu0 %v265
      %406 = vmatprep.subr.mxu0 %v258
      %407 = vmatpush1.msra.mxu0 %v257
      %408 = vmatprep.subr.mxu0 %v250
      %409 = vmatpush1.msra.mxu0 %v249
      %410 = vmatprep.subr.mxu0 %v242
      %411 = vmatpush1.msra.mxu0 %v241
      %412 = vmatprep.subr.mxu0 %v234
      %413 = vmatpush1.msra.mxu0 %v233
      %414 = vmatprep.subr.mxu0 %v226
      %415 = vmatpush1.msra.mxu0 %v225
      %416 = vmatprep.subr.mxu0 %v218
      %417 = vmatpush1.msra.mxu0 %v217
      %418 = vmatprep.subr.mxu0 %v210
      %419 = vmatpush1.msra.mxu0 %v209
      %420 = vmatprep.subr.mxu0 %v202
      %421 = vmatpush1.msra.mxu0 %v201
      %422 = vmatprep.subr.mxu0 %v194
      %423 = vmatpush1.msra.mxu0 %v193
      %424 = vmatprep.subr.mxu0 %v186
      %425 = vmatpush1.msra.mxu0 %v185
      %426 = vmatprep.subr.mxu0 %v178
      %427 = vmatpush1.msra.mxu0 %v177
      %428 = vmatprep.subr.mxu0 %v170
      %429 = vmatpush1.msra.mxu0 %v169
      %430 = vmatprep.subr.mxu0 %v162
      %431 = vmatpush1.msra.mxu0 %v161
      %432 = vmatprep.subr.mxu0 %v154
      %433 = vmatpush1.msra.mxu0 %v153
      %434 = vmatprep.subr.mxu0 %v146
      %435 = vmatpush1.msra.mxu0 %v145
      %436 = vmatprep.subr.mxu0 %v394
      %437 = vmatpush2.msra.mxu0 %v393
      %438 = vmatprep.subr.mxu0 %v386
      %439 = vmatpush2.msra.mxu0 %v385
      %440 = vmatprep.subr.mxu0 %v378
      %441 = vmatpush2.msra.mxu0 %v377
      %442 = vmatprep.subr.mxu0 %v370
      %443 = vmatpush2.msra.mxu0 %v369
      %444 = vmatprep.subr.mxu0 %v362
      %445 = vmatpush2.msra.mxu0 %v361
      %446 = vmatprep.subr.mxu0 %v354
      %447 = vmatpush2.msra.mxu0 %v353
      %448 = vmatprep.subr.mxu0 %v346
      %449 = vmatpush2.msra.mxu0 %v345
      %450 = vmatprep.subr.mxu0 %v338
      %451 = vmatpush2.msra.mxu0 %v337
      %452 = vmatprep.subr.mxu0 %v330
      %453 = vmatpush2.msra.mxu0 %v329
      %454 = vmatprep.subr.mxu0 %v322
      %455 = vmatpush2.msra.mxu0 %v321
      %456 = vmatprep.subr.mxu0 %v314
      %457 = vmatpush2.msra.mxu0 %v313
      %458 = vmatprep.subr.mxu0 %v306
      %459 = vmatpush2.msra.mxu0 %v305
      %460 = vmatprep.subr.mxu0 %v298
      %461 = vmatpush2.msra.mxu0 %v297
      %462 = vmatprep.subr.mxu0 %v290
      %463 = vmatpush2.msra.mxu0 %v289
      %464 = vmatprep.subr.mxu0 %v282
      %465 = vmatpush2.msra.mxu0 %v281
      %466 = vmatprep.subr.mxu0 %v274
      %467 = vmatpush2.msra.mxu0 %v273
      %468 = vmatprep.mubr.f32.mxu0 %v402
      %469 = vmatmul.mubr.f32.gmra.mxu0 %v144
      %v470 = vpop.f32.mrf.mxu0
      %v471 = vadd.f32 0.0, %v470
      %v472 = vpop.f32.mrf.mxu0
      %v473 = vadd.f32 0.0, %v472
      %474 = vdwg.mxu0
      %475 = vmatprep.subr.mxu0 %v268
      %476 = vmatpush1.msra.mxu0 %v267
      %477 = vmatprep.subr.mxu0 %v260
      %478 = vmatpush1.msra.mxu0 %v259
      %479 = vmatprep.subr.mxu0 %v252
      %480 = vmatpush1.msra.mxu0 %v251
      %481 = vmatprep.subr.mxu0 %v244
      %482 = vmatpush1.msra.mxu0 %v243
      %483 = vmatprep.subr.mxu0 %v236
      %484 = vmatpush1.msra.mxu0 %v235
      %485 = vmatprep.subr.mxu0 %v228
      %486 = vmatpush1.msra.mxu0 %v227
      %487 = vmatprep.subr.mxu0 %v220
      %488 = vmatpush1.msra.mxu0 %v219
      %489 = vmatprep.subr.mxu0 %v212
      %490 = vmatpush1.msra.mxu0 %v211
      %491 = vmatprep.subr.mxu0 %v204
      %492 = vmatpush1.msra.mxu0 %v203
      %493 = vmatprep.subr.mxu0 %v196
      %494 = vmatpush1.msra.mxu0 %v195
      %495 = vmatprep.subr.mxu0 %v188
      %496 = vmatpush1.msra.mxu0 %v187
      %497 = vmatprep.subr.mxu0 %v180
      %498 = vmatpush1.msra.mxu0 %v179
      %499 = vmatprep.subr.mxu0 %v172
      %500 = vmatpush1.msra.mxu0 %v171
      %501 = vmatprep.subr.mxu0 %v164
      %502 = vmatpush1.msra.mxu0 %v163
      %503 = vmatprep.subr.mxu0 %v156
      %504 = vmatpush1.msra.mxu0 %v155
      %505 = vmatprep.subr.mxu0 %v148
      %506 = vmatpush1.msra.mxu0 %v147
      %507 = vmatprep.subr.mxu0 %v396
      %508 = vmatpush2.msra.mxu0 %v395
      %509 = vmatprep.subr.mxu0 %v388
      %510 = vmatpush2.msra.mxu0 %v387
      %511 = vmatprep.subr.mxu0 %v380
      %512 = vmatpush2.msra.mxu0 %v379
      %513 = vmatprep.subr.mxu0 %v372
      %514 = vmatpush2.msra.mxu0 %v371
      %515 = vmatprep.subr.mxu0 %v364
      %516 = vmatpush2.msra.mxu0 %v363
      %517 = vmatprep.subr.mxu0 %v356
      %518 = vmatpush2.msra.mxu0 %v355
      %519 = vmatprep.subr.mxu0 %v348
      %520 = vmatpush2.msra.mxu0 %v347
      %521 = vmatprep.subr.mxu0 %v340
      %522 = vmatpush2.msra.mxu0 %v339
      %523 = vmatprep.subr.mxu0 %v332
      %524 = vmatpush2.msra.mxu0 %v331
      %525 = vmatprep.subr.mxu0 %v324
      %526 = vmatpush2.msra.mxu0 %v323
      %527 = vmatprep.subr.mxu0 %v316
      %528 = vmatpush2.msra.mxu0 %v315
      %529 = vmatprep.subr.mxu0 %v308
      %530 = vmatpush2.msra.mxu0 %v307
      %531 = vmatprep.subr.mxu0 %v300
      %532 = vmatpush2.msra.mxu0 %v299
      %533 = vmatprep.subr.mxu0 %v292
      %534 = vmatpush2.msra.mxu0 %v291
      %535 = vmatprep.subr.mxu0 %v284
      %536 = vmatpush2.msra.mxu0 %v283
      %537 = vmatprep.subr.mxu0 %v276
      %538 = vmatpush2.msra.mxu0 %v275
      %539 = vmatprep.mubr.f32.mxu0 %v402
      %540 = vmatmul.mubr.f32.gmra.mxu0 %v144
      %v541 = vpop.f32.mrf.mxu0
      %v542 = vadd.f32 0.0, %v541
      %v543 = vpop.f32.mrf.mxu0
      %v544 = vadd.f32 0.0, %v543
      %545 = vdwg.mxu0
      %546 = vmatprep.subr.mxu0 %v270
      %547 = vmatpush1.msra.mxu0 %v269
      %548 = vmatprep.subr.mxu0 %v262
      %549 = vmatpush1.msra.mxu0 %v261
      %550 = vmatprep.subr.mxu0 %v254
      %551 = vmatpush1.msra.mxu0 %v253
      %552 = vmatprep.subr.mxu0 %v246
      %553 = vmatpush1.msra.mxu0 %v245
      %554 = vmatprep.subr.mxu0 %v238
      %555 = vmatpush1.msra.mxu0 %v237
      %556 = vmatprep.subr.mxu0 %v230
      %557 = vmatpush1.msra.mxu0 %v229
      %558 = vmatprep.subr.mxu0 %v222
      %559 = vmatpush1.msra.mxu0 %v221
      %560 = vmatprep.subr.mxu0 %v214
      %561 = vmatpush1.msra.mxu0 %v213
      %562 = vmatprep.subr.mxu0 %v206
      %563 = vmatpush1.msra.mxu0 %v205
      %564 = vmatprep.subr.mxu0 %v198
      %565 = vmatpush1.msra.mxu0 %v197
      %566 = vmatprep.subr.mxu0 %v190
      %567 = vmatpush1.msra.mxu0 %v189
      %568 = vmatprep.subr.mxu0 %v182
      %569 = vmatpush1.msra.mxu0 %v181
      %570 = vmatprep.subr.mxu0 %v174
      %571 = vmatpush1.msra.mxu0 %v173
      %572 = vmatprep.subr.mxu0 %v166
      %573 = vmatpush1.msra.mxu0 %v165
      %574 = vmatprep.subr.mxu0 %v158
      %575 = vmatpush1.msra.mxu0 %v157
      %576 = vmatprep.subr.mxu0 %v150
      %577 = vmatpush1.msra.mxu0 %v149
      %578 = vmatprep.subr.mxu0 %v398
      %579 = vmatpush2.msra.mxu0 %v397
      %580 = vmatprep.subr.mxu0 %v390
      %581 = vmatpush2.msra.mxu0 %v389
      %582 = vmatprep.subr.mxu0 %v382
      %583 = vmatpush2.msra.mxu0 %v381
      %584 = vmatprep.subr.mxu0 %v374
      %585 = vmatpush2.msra.mxu0 %v373
      %586 = vmatprep.subr.mxu0 %v366
      %587 = vmatpush2.msra.mxu0 %v365
      %588 = vmatprep.subr.mxu0 %v358
      %589 = vmatpush2.msra.mxu0 %v357
      %590 = vmatprep.subr.mxu0 %v350
      %591 = vmatpush2.msra.mxu0 %v349
      %592 = vmatprep.subr.mxu0 %v342
      %593 = vmatpush2.msra.mxu0 %v341
      %594 = vmatprep.subr.mxu0 %v334
      %595 = vmatpush2.msra.mxu0 %v333
      %596 = vmatprep.subr.mxu0 %v326
      %597 = vmatpush2.msra.mxu0 %v325
      %598 = vmatprep.subr.mxu0 %v318
      %599 = vmatpush2.msra.mxu0 %v317
      %600 = vmatprep.subr.mxu0 %v310
      %601 = vmatpush2.msra.mxu0 %v309
      %602 = vmatprep.subr.mxu0 %v302
      %603 = vmatpush2.msra.mxu0 %v301
      %604 = vmatprep.subr.mxu0 %v294
      %605 = vmatpush2.msra.mxu0 %v293
      %606 = vmatprep.subr.mxu0 %v286
      %607 = vmatpush2.msra.mxu0 %v285
      %608 = vmatprep.subr.mxu0 %v278
      %609 = vmatpush2.msra.mxu0 %v277
      %610 = vmatprep.mubr.f32.mxu0 %v402
      %611 = vmatmul.mubr.f32.gmra.mxu0 %v144
      %v612 = vpop.f32.mrf.mxu0
      %v613 = vadd.f32 0.0, %v612
      %v614 = vpop.f32.mrf.mxu0
      %v615 = vadd.f32 0.0, %v614
      %616 = vdwg.mxu0
      %617 = vmatprep.subr.mxu0 %v272
      %618 = vmatpush1.msra.mxu0 %v271
      %619 = vmatprep.subr.mxu0 %v264
      %620 = vmatpush1.msra.mxu0 %v263
      %621 = vmatprep.subr.mxu0 %v256
      %622 = vmatpush1.msra.mxu0 %v255
      %623 = vmatprep.subr.mxu0 %v248
      %624 = vmatpush1.msra.mxu0 %v247
      %625 = vmatprep.subr.mxu0 %v240
      %626 = vmatpush1.msra.mxu0 %v239
      %627 = vmatprep.subr.mxu0 %v232
      %628 = vmatpush1.msra.mxu0 %v231
      %629 = vmatprep.subr.mxu0 %v224
      %630 = vmatpush1.msra.mxu0 %v223
      %631 = vmatprep.subr.mxu0 %v216
      %632 = vmatpush1.msra.mxu0 %v215
      %633 = vmatprep.subr.mxu0 %v208
      %634 = vmatpush1.msra.mxu0 %v207
      %635 = vmatprep.subr.mxu0 %v200
      %636 = vmatpush1.msra.mxu0 %v199
      %637 = vmatprep.subr.mxu0 %v192
      %638 = vmatpush1.msra.mxu0 %v191
      %639 = vmatprep.subr.mxu0 %v184
      %640 = vmatpush1.msra.mxu0 %v183
      %641 = vmatprep.subr.mxu0 %v176
      %642 = vmatpush1.msra.mxu0 %v175
      %643 = vmatprep.subr.mxu0 %v168
      %644 = vmatpush1.msra.mxu0 %v167
      %645 = vmatprep.subr.mxu0 %v160
      %646 = vmatpush1.msra.mxu0 %v159
      %647 = vmatprep.subr.mxu0 %v152
      %648 = vmatpush1.msra.mxu0 %v151
      %649 = vmatprep.subr.mxu0 %v400
      %650 = vmatpush2.msra.mxu0 %v399
      %651 = vmatprep.subr.mxu0 %v392
      %652 = vmatpush2.msra.mxu0 %v391
      %653 = vmatprep.subr.mxu0 %v384
      %654 = vmatpush2.msra.mxu0 %v383
      %655 = vmatprep.subr.mxu0 %v376
      %656 = vmatpush2.msra.mxu0 %v375
      %657 = vmatprep.subr.mxu0 %v368
      %658 = vmatpush2.msra.mxu0 %v367
      %659 = vmatprep.subr.mxu0 %v360
      %660 = vmatpush2.msra.mxu0 %v359
      %661 = vmatprep.subr.mxu0 %v352
      %662 = vmatpush2.msra.mxu0 %v351
      %663 = vmatprep.subr.mxu0 %v344
      %664 = vmatpush2.msra.mxu0 %v343
      %665 = vmatprep.subr.mxu0 %v336
      %666 = vmatpush2.msra.mxu0 %v335
      %667 = vmatprep.subr.mxu0 %v328
      %668 = vmatpush2.msra.mxu0 %v327
      %669 = vmatprep.subr.mxu0 %v320
      %670 = vmatpush2.msra.mxu0 %v319
      %671 = vmatprep.subr.mxu0 %v312
      %672 = vmatpush2.msra.mxu0 %v311
      %673 = vmatprep.subr.mxu0 %v304
      %674 = vmatpush2.msra.mxu0 %v303
      %675 = vmatprep.subr.mxu0 %v296
      %676 = vmatpush2.msra.mxu0 %v295
      %677 = vmatprep.subr.mxu0 %v288
      %678 = vmatpush2.msra.mxu0 %v287
      %679 = vmatprep.subr.mxu0 %v280
      %680 = vmatpush2.msra.mxu0 %v279
      %681 = vmatprep.mubr.f32.mxu0 %v402
      %682 = vmatmul.mubr.f32.gmra.mxu0 %v144
      %v683 = vpop.f32.mrf.mxu0
      %v684 = vadd.f32 0.0, %v683
      %v685 = vpop.f32.mrf.mxu0
      %v686 = vadd.f32 0.0, %v685
      %687 = vdwg.mxu0
      %v696 = vcombine.low %v471, %v473
      %v697 = vcombine.low %v542, %v544
      %v698 = vcombine.low %v613, %v615
      %v699 = vcombine.low %v684, %v686
      %704 = vst [vmem:[%s143] sm:$0xff] %v696
      %705 = vst [vmem:[%s143 + $0x8] sm:$0xff] %v697
      %706 = vst [vmem:[%s143 + $0x10] sm:$0xff] %v698
      %707 = vst [vmem:[%s143 + $0x18] sm:$0xff] %v699
      %p708 = scmp.lt.s32.totalorder %s13, 1
      %s709 = scalar_select %p708, %s13, 1
      %s710 = smul.addr %s709, 8
      %s711 = smul.addr %s710, 4
      %s712 = scalar_lea.vmem %s2, %s711
      // Predicated region
      $region29: #{up_bilinear_2x.1} parent=27 // pred_check
        %p713 = pneg %p78
      $region30: #{up_bilinear_2x.1} parent=27 // pred_check_branch
        %715 = sbr.rel (%p713) target = $region32
      $region31: #{up_bilinear_2x.1} parent=27 // pred_region
        _
      $region32: #{up_bilinear_2x.1} parent=27 // pred_fallthru
        _
    $region28: #{up_bilinear_2x.1} parent=5 // pred_fallthru
      _
    %p716 = scmp.le.s32.totalorder 2, %s8
    // Predicated region
    $region33: #{up_bilinear_2x.1} parent=5 // pred_check
      %p717 = pneg %p716
    $region34: #{up_bilinear_2x.1} parent=5 // pred_check_branch
      %719 = sbr.rel (%p717) target = $region36
    $region35: #{up_bilinear_2x.1} parent=5 // pred_region
      %s720 = ssub.s32 %s8, 2
      // Predicated region
      $region37: #{up_bilinear_2x.1} parent=35 // pred_check
        %p721 = pneg %p84
      $region38: #{up_bilinear_2x.1} parent=35 // pred_check_branch
        %723 = sbr.rel (%p721) target = $region40
      $region39: #{up_bilinear_2x.1} parent=35 // pred_region
        %p724 = scmp.lt.s32.totalorder %s14, 1
        %s725 = scalar_select %p724, %s14, 1
        %s726 = smul.addr %s725, 8
        %s727 = smul.addr %s726, 4
        %s728 = scalar_lea.vmem %s2, %s727
      $region40: #{up_bilinear_2x.1} parent=35 // pred_fallthru
        _
    $region36: #{up_bilinear_2x.1} parent=5 // pred_fallthru
      _
  $region6: #{up_bilinear_2x.1} parent=0 // loop_footer
    %s12 = sadd.s32 1, %s8
  $region7: #{up_bilinear_2x.1} parent=0 // loop_footer_branch
    %7 = sbr.rel target = $region3
  $region8: #{up_bilinear_2x.1} parent=0 // loop_exit
    _

</llo_original>
